<compile_context>
chip_gen: v7x
topology: tpu7x:2x2x1
jax: 0.10.0
libtpu: 0.0.40
codegen_flags: <defaults>
</compile_context>

<pallas_src>
import functools

import jax
import jax.numpy as jnp
from jax.experimental import pallas as pl
from jax.experimental.pallas import tpu as pltpu


def _round_up(x, m):
    return ((x + m - 1) // m) * m


def _mlp_kernel(x_ref, w_in_ref, b_in_ref, wh_ref, bh_ref, w_out_ref, b_out_ref,
                o_ref, *, num_hidden):
    cdt = w_in_ref.dtype  # matmul operand dtype (bf16 or f32); accumulation f32
    h = jnp.dot(x_ref[...].astype(cdt), w_in_ref[...],
                preferred_element_type=jnp.float32)
    h = jnp.maximum(h + b_in_ref[...], 0.0)
    for i in range(num_hidden):  # static python int -> fully unrolled
        h = jnp.dot(h.astype(cdt), wh_ref[i], preferred_element_type=jnp.float32)
        h = jnp.maximum(h + bh_ref[i], 0.0)
    out = jnp.dot(h.astype(cdt), w_out_ref[...], preferred_element_type=jnp.float32)
    o_ref[...] = (out + b_out_ref[...]).astype(o_ref.dtype)


def _mlp_kernel_no_hidden(x_ref, w_in_ref, b_in_ref, w_out_ref, b_out_ref, o_ref):
    cdt = w_in_ref.dtype
    h = jnp.dot(x_ref[...].astype(cdt), w_in_ref[...],
                preferred_element_type=jnp.float32)
    h = jnp.maximum(h + b_in_ref[...], 0.0)
    out = jnp.dot(h.astype(cdt), w_out_ref[...], preferred_element_type=jnp.float32)
    o_ref[...] = (out + b_out_ref[...]).astype(o_ref.dtype)


def init_params(key, in_dim, out_dim, num_hidden, hidden_size,
                compute_dtype=jnp.bfloat16):
    """torch-equivalent init (W ~ N(0, 0.1), b = 0.1), stored kernel-ready.

    Weights are transposed to (in_features, out_features) so y = x @ W + b.
    Output weight/bias are lane-padded (out_dim -> multiple of 128) once here,
    so the per-call forward does zero parameter copies.  Weights are stored in
    `compute_dtype` (bf16 by default) for MXU throughput / HBM bytes; biases
    stay f32 (they are added after the f32 accumulation).
    """
    out_p = _round_up(out_dim, 128)
    k_in, k_h, k_out = jax.random.split(key, 3)

    w_out_p = jnp.zeros((hidden_size, out_p), jnp.float32)
    w_out_p = w_out_p.at[:, :out_dim].set(
        0.1 * jax.random.normal(k_out, (hidden_size, out_dim), jnp.float32))
    b_out_p = jnp.zeros((1, out_p), jnp.float32).at[:, :out_dim].set(0.1)

    params = {
        "w_in": (0.1 * jax.random.normal(
            k_in, (in_dim, hidden_size), jnp.float32)).astype(compute_dtype),
        "b_in": jnp.full((1, hidden_size), 0.1, jnp.float32),
        "w_out": w_out_p.astype(compute_dtype),
        "b_out": b_out_p,
    }
    if num_hidden > 0:
        params["w_h"] = (0.1 * jax.random.normal(
            k_h, (num_hidden, hidden_size, hidden_size),
            jnp.float32)).astype(compute_dtype)
        params["b_h"] = jnp.full((num_hidden, 1, hidden_size), 0.1, jnp.float32)
    return params


def networks_forward(x, params, num_hidden, out_dim, *, tile_m=512):
    batch, in_dim = x.shape
    hidden_size = params["w_in"].shape[1]
    out_p = params["w_out"].shape[1]  # already a multiple of 128 (init_params)
    x = x.astype(jnp.float32)

    # Batch: pad only to a multiple of 8 sublanes (and only when needed).
    # The last tile may be ragged: the pl.cdiv grid handles it (clamped OOB
    # reads/writes), and garbage rows never contaminate valid rows since the
    # MLP is row-wise.
    batch_p = _round_up(batch, 8)
    if batch_p != batch:
        x = jnp.pad(x, ((0, batch_p - batch), (0, 0)))

    tm = _round_up(min(tile_m, batch_p), 8)
    if batch_p > 8 and pl.cdiv(batch_p, tm) < 2:
        # v7x has 2 TensorCores: make sure both get a tile; harmless on v5e/v6e.
        tm = _round_up(pl.cdiv(batch_p, 2), 8)
    grid = (pl.cdiv(batch_p, tm),)

    weight_args = [params["w_in"], params["b_in"]]
    if num_hidden > 0:
        weight_args += [params["w_h"], params["b_h"]]
        kernel = functools.partial(_mlp_kernel, num_hidden=num_hidden)
    else:
        kernel = _mlp_kernel_no_hidden
    weight_args += [params["w_out"], params["b_out"]]

    w_bytes = sum(int(a.size) * a.dtype.itemsize for a in weight_args)
    flops = 2 * batch_p * (in_dim * hidden_size
                           + num_hidden * hidden_size * hidden_size
                           + hidden_size * out_p)
    bytes_accessed = batch_p * (in_dim + out_p) * 4 + w_bytes
    cost = pl.CostEstimate(flops=flops, transcendentals=0,
                           bytes_accessed=bytes_accessed)

    # Generation-aware VMEM capacity (v5e/v6e: 128 MiB, v7x: 64 MiB per TC).
    try:
        vmem_cap = int(pltpu.get_tpu_info().vmem_capacity_bytes)
    except Exception:
        vmem_cap = 64 << 20

    def run(weight_pipeline_mode):
        def wspec(a):
            nz = a.ndim
            idx = lambda i, nz=nz: (0,) * nz  # VMEM-resident across the grid
            if weight_pipeline_mode is None:
                return pl.BlockSpec(a.shape, idx)
            return pl.BlockSpec(a.shape, idx, pipeline_mode=weight_pipeline_mode)

        in_specs = [pl.BlockSpec((tm, in_dim), lambda i: (i, 0))]
        in_specs += [wspec(a) for a in weight_args]

        weight_copies = 1 if weight_pipeline_mode is not None else 2
        act_bytes = 2 * tm * (in_dim + out_p) * 4        # double-buffered tiles
        interm_bytes = 4 * tm * max(hidden_size, out_p) * 4
        need = weight_copies * w_bytes + act_bytes + interm_bytes + (4 << 20)
        vmem_limit = int(max(16 << 20, min(need, vmem_cap - (8 << 20))))

        return pl.pallas_call(
            kernel,
            out_shape=jax.ShapeDtypeStruct((batch_p, out_p), jnp.float32),
            grid=grid,
            in_specs=in_specs,
            out_specs=pl.BlockSpec((tm, out_p), lambda i: (i, 0)),
            compiler_params=pltpu.CompilerParams(
                dimension_semantics=("parallel",),
                vmem_limit_bytes=vmem_limit,
            ),
            cost_estimate=cost,
        )(x, *weight_args)

    try:
        # Weights never change across the batch grid -> single-buffer them
        # (halves weight VMEM; matters for big hidden sizes on v7x's 64 MiB).
        out_padded = jax.block_until_ready(run(pl.Buffered(1)))
    except Exception:
        # Fallback: default double-buffered pipelining for the weights.
        out_padded = run(None)

    return out_padded[:batch, :out_dim]


def networks_reference(x, params, num_hidden, out_dim):
    f32 = lambda a: a.astype(jnp.float32)
    h = jnp.maximum(x @ f32(params["w_in"]) + params["b_in"], 0.0)
    for i in range(num_hidden):
        h = jnp.maximum(h @ f32(params["w_h"])[i] + params["b_h"][i], 0.0)
    return (h @ f32(params["w_out"]) + params["b_out"])[:, :out_dim]


if __name__ == "__main__":
    # Small shapes consistent with the module's forward.
    batch, in_dim, hidden_size, num_hidden, out_dim = 2, 4, 32, 2, 3

    key = jax.random.PRNGKey(0)
    k_x, k_p = jax.random.split(key)
    x = jax.random.normal(k_x, (batch, in_dim), jnp.float32)

    # f32 operand path: matches torch fp32 numerics exactly (tight tolerance).
    params_f32 = init_params(k_p, in_dim, out_dim, num_hidden, hidden_size,
                             compute_dtype=jnp.float32)
    out = jax.block_until_ready(networks_forward(x, params_f32, num_hidden, out_dim))
    ref = networks_reference(x, params_f32, num_hidden, out_dim)
    assert out.shape == (batch, out_dim)
    assert jnp.allclose(out, ref, atol=1e-5, rtol=1e-5), "mismatch (f32)"

    # Default bf16-operand path (f32 accumulation): looser tolerance.
    params_bf16 = init_params(k_p, in_dim, out_dim, num_hidden, hidden_size)
    out_bf = jax.block_until_ready(
        networks_forward(x, params_bf16, num_hidden, out_dim))
    ref_bf = networks_reference(x, params_bf16, num_hidden, out_dim)
    assert jnp.allclose(out_bf, ref_bf, atol=3e-2, rtol=3e-2), "mismatch (bf16)"

    # num_hidden == 0 path (separate kernel, no zero-extent arrays).
    params0 = init_params(k_p, in_dim, out_dim, 0, hidden_size,
                          compute_dtype=jnp.float32)
    out0 = jax.block_until_ready(networks_forward(x, params0, 0, out_dim))
    ref0 = networks_reference(x, params0, 0, out_dim)
    assert jnp.allclose(out0, ref0, atol=1e-5, rtol=1e-5), "mismatch (no hidden)"

    print("KERNEL_OK")
</pallas_src>

<mosaic_0001>
module attributes {stable_mosaic.version = 11 : i64} {
  func.func @_mlp_kernel(%arg0: i32, %arg1: memref<8x4xf32, #tpu.memory_space<vmem>>, %arg2: memref<4x32xf32, #tpu.memory_space<vmem>>, %arg3: memref<1x32xf32, #tpu.memory_space<vmem>>, %arg4: memref<2x32x32xf32, #tpu.memory_space<vmem>>, %arg5: memref<2x1x32xf32, #tpu.memory_space<vmem>>, %arg6: memref<32x128xf32, #tpu.memory_space<vmem>>, %arg7: memref<1x128xf32, #tpu.memory_space<vmem>>, %arg8: memref<8x128xf32, #tpu.memory_space<vmem>>) attributes {dimension_semantics = [#tpu.dimension_semantics<parallel>], iteration_bounds = array<i64: 1>, scalar_prefetch = 0 : i64, scratch_operands = 0 : i64, tpu.core_type = #tpu.core_type<tc>, window_params = [{transform_indices = @transform_0, window_bounds = array<i64: 8, 4>}, {pipeline_mode = #tpu.pipeline_mode<synchronous>, transform_indices = @transform_1, window_bounds = array<i64: 4, 32>}, {pipeline_mode = #tpu.pipeline_mode<synchronous>, transform_indices = @transform_2, window_bounds = array<i64: 1, 32>}, {pipeline_mode = #tpu.pipeline_mode<synchronous>, transform_indices = @transform_3, window_bounds = array<i64: 2, 32, 32>}, {pipeline_mode = #tpu.pipeline_mode<synchronous>, transform_indices = @transform_4, window_bounds = array<i64: 2, 1, 32>}, {pipeline_mode = #tpu.pipeline_mode<synchronous>, transform_indices = @transform_5, window_bounds = array<i64: 32, 128>}, {pipeline_mode = #tpu.pipeline_mode<synchronous>, transform_indices = @transform_6, window_bounds = array<i64: 1, 128>}, {transform_indices = @transform_7, window_bounds = array<i64: 8, 128>}]} {
    %c0 = arith.constant 0 : index
    %c0_0 = arith.constant 0 : index
    %0 = vector.load %arg1[%c0, %c0_0] : memref<8x4xf32, #tpu.memory_space<vmem>>, vector<8x4xf32>
    %c0_1 = arith.constant 0 : index
    %c0_2 = arith.constant 0 : index
    %1 = vector.load %arg2[%c0_1, %c0_2] : memref<4x32xf32, #tpu.memory_space<vmem>>, vector<4x32xf32>
    %cst = arith.constant dense<0.000000e+00> : vector<8x32xf32>
    %2 = tpu.matmul %0, %1, %cst {dimension_numbers = #tpu.dot_dimension_numbers<[1], [0], [0], [1], [0, 0, 1, 1], [], []>} : vector<8x4xf32>, vector<4x32xf32>, vector<8x32xf32> -> vector<8x32xf32>
    %c0_3 = arith.constant 0 : index
    %c0_4 = arith.constant 0 : index
    %3 = vector.load %arg3[%c0_3, %c0_4] : memref<1x32xf32, #tpu.memory_space<vmem>>, vector<1x32xf32>
    %4 = vector.broadcast %3 : vector<1x32xf32> to vector<8x32xf32>
    %5 = arith.addf %2, %4 : vector<8x32xf32>
    %cst_5 = arith.constant 0.000000e+00 : f32
    %6 = vector.broadcast %cst_5 : f32 to vector<8x32xf32>
    %7 = arith.maximumf %5, %6 : vector<8x32xf32>
    %c0_6 = arith.constant 0 : index
    %c0_7 = arith.constant 0 : index
    %c0_8 = arith.constant 0 : index
    %8 = vector.load %arg4[%c0_6, %c0_7, %c0_8] : memref<2x32x32xf32, #tpu.memory_space<vmem>>, vector<1x32x32xf32>
    %9 = vector.shape_cast %8 : vector<1x32x32xf32> to vector<32x32xf32>
    %cst_9 = arith.constant dense<0.000000e+00> : vector<8x32xf32>
    %10 = tpu.matmul %7, %9, %cst_9 {dimension_numbers = #tpu.dot_dimension_numbers<[1], [0], [0], [1], [0, 0, 1, 1], [], []>} : vector<8x32xf32>, vector<32x32xf32>, vector<8x32xf32> -> vector<8x32xf32>
    %c0_10 = arith.constant 0 : index
    %c0_11 = arith.constant 0 : index
    %c0_12 = arith.constant 0 : index
    %11 = vector.load %arg5[%c0_10, %c0_11, %c0_12] : memref<2x1x32xf32, #tpu.memory_space<vmem>>, vector<1x1x32xf32>
    %12 = vector.shape_cast %11 : vector<1x1x32xf32> to vector<1x32xf32>
    %13 = vector.broadcast %12 : vector<1x32xf32> to vector<8x32xf32>
    %14 = arith.addf %10, %13 : vector<8x32xf32>
    %cst_13 = arith.constant 0.000000e+00 : f32
    %15 = vector.broadcast %cst_13 : f32 to vector<8x32xf32>
    %16 = arith.maximumf %14, %15 : vector<8x32xf32>
    %c1 = arith.constant 1 : index
    %c0_14 = arith.constant 0 : index
    %c0_15 = arith.constant 0 : index
    %17 = vector.load %arg4[%c1, %c0_14, %c0_15] : memref<2x32x32xf32, #tpu.memory_space<vmem>>, vector<1x32x32xf32>
    %18 = vector.shape_cast %17 : vector<1x32x32xf32> to vector<32x32xf32>
    %cst_16 = arith.constant dense<0.000000e+00> : vector<8x32xf32>
    %19 = tpu.matmul %16, %18, %cst_16 {dimension_numbers = #tpu.dot_dimension_numbers<[1], [0], [0], [1], [0, 0, 1, 1], [], []>} : vector<8x32xf32>, vector<32x32xf32>, vector<8x32xf32> -> vector<8x32xf32>
    %c1_17 = arith.constant 1 : index
    %c0_18 = arith.constant 0 : index
    %c0_19 = arith.constant 0 : index
    %20 = vector.load %arg5[%c1_17, %c0_18, %c0_19] : memref<2x1x32xf32, #tpu.memory_space<vmem>>, vector<1x1x32xf32>
    %21 = vector.shape_cast %20 : vector<1x1x32xf32> to vector<1x32xf32>
    %22 = vector.broadcast %21 : vector<1x32xf32> to vector<8x32xf32>
    %23 = arith.addf %19, %22 : vector<8x32xf32>
    %cst_20 = arith.constant 0.000000e+00 : f32
    %24 = vector.broadcast %cst_20 : f32 to vector<8x32xf32>
    %25 = arith.maximumf %23, %24 : vector<8x32xf32>
    %c0_21 = arith.constant 0 : index
    %c0_22 = arith.constant 0 : index
    %26 = vector.load %arg6[%c0_21, %c0_22] : memref<32x128xf32, #tpu.memory_space<vmem>>, vector<32x128xf32>
    %cst_23 = arith.constant dense<0.000000e+00> : vector<8x128xf32>
    %27 = tpu.matmul %25, %26, %cst_23 {dimension_numbers = #tpu.dot_dimension_numbers<[1], [0], [0], [1], [0, 0, 1, 1], [], []>} : vector<8x32xf32>, vector<32x128xf32>, vector<8x128xf32> -> vector<8x128xf32>
    %c0_24 = arith.constant 0 : index
    %c0_25 = arith.constant 0 : index
    %28 = vector.load %arg7[%c0_24, %c0_25] : memref<1x128xf32, #tpu.memory_space<vmem>>, vector<1x128xf32>
    %29 = vector.broadcast %28 : vector<1x128xf32> to vector<8x128xf32>
    %30 = arith.addf %27, %29 : vector<8x128xf32>
    %c0_26 = arith.constant 0 : index
    %c0_27 = arith.constant 0 : index
    %31 = vector.load %arg8[%c0_26, %c0_27] : memref<8x128xf32, #tpu.memory_space<vmem>>, vector<8x128xf32>
    tpu.vector_store %arg8[%c0_26, %c0_27], %30 {strides = array<i32>} : memref<8x128xf32, #tpu.memory_space<vmem>>, vector<8x128xf32>,
    return
  }
  func.func @transform_0(%arg0: i32) -> (i32, i32) {
    %c0_i32 = arith.constant 0 : i32
    %c0_i32_0 = arith.constant 0 : i32
    return %arg0, %c0_i32 : i32, i32
  }
  func.func @transform_1(%arg0: i32) -> (i32, i32) {
    %c0_i32 = arith.constant 0 : i32
    %c0_i32_0 = arith.constant 0 : i32
    %c0_i32_1 = arith.constant 0 : i32
    return %c0_i32, %c0_i32_0 : i32, i32
  }
  func.func @transform_2(%arg0: i32) -> (i32, i32) {
    %c0_i32 = arith.constant 0 : i32
    %c0_i32_0 = arith.constant 0 : i32
    %c0_i32_1 = arith.constant 0 : i32
    return %c0_i32, %c0_i32_0 : i32, i32
  }
  func.func @transform_3(%arg0: i32) -> (i32, i32, i32) {
    %c0_i32 = arith.constant 0 : i32
    %c0_i32_0 = arith.constant 0 : i32
    %c0_i32_1 = arith.constant 0 : i32
    %c0_i32_2 = arith.constant 0 : i32
    return %c0_i32, %c0_i32_0, %c0_i32_1 : i32, i32, i32
  }
  func.func @transform_4(%arg0: i32) -> (i32, i32, i32) {
    %c0_i32 = arith.constant 0 : i32
    %c0_i32_0 = arith.constant 0 : i32
    %c0_i32_1 = arith.constant 0 : i32
    %c0_i32_2 = arith.constant 0 : i32
    return %c0_i32, %c0_i32_0, %c0_i32_1 : i32, i32, i32
  }
  func.func @transform_5(%arg0: i32) -> (i32, i32) {
    %c0_i32 = arith.constant 0 : i32
    %c0_i32_0 = arith.constant 0 : i32
    %c0_i32_1 = arith.constant 0 : i32
    return %c0_i32, %c0_i32_0 : i32, i32
  }
  func.func @transform_6(%arg0: i32) -> (i32, i32) {
    %c0_i32 = arith.constant 0 : i32
    %c0_i32_0 = arith.constant 0 : i32
    %c0_i32_1 = arith.constant 0 : i32
    return %c0_i32, %c0_i32_0 : i32, i32
  }
  func.func @transform_7(%arg0: i32) -> (i32, i32) {
    %c0_i32 = arith.constant 0 : i32
    %c0_i32_0 = arith.constant 0 : i32
    return %arg0, %c0_i32 : i32, i32
  }
}

module attributes {stable_mosaic.version = 11 : i64} {
  func.func @_mlp_kernel(%arg0: i32, %arg1: memref<8x4xf32, #tpu.memory_space<vmem>>, %arg2: memref<4x32xf32, #tpu.memory_space<vmem>>, %arg3: memref<1x32xf32, #tpu.memory_space<vmem>>, %arg4: memref<2x32x32xf32, #tpu.memory_space<vmem>>, %arg5: memref<2x1x32xf32, #tpu.memory_space<vmem>>, %arg6: memref<32x128xf32, #tpu.memory_space<vmem>>, %arg7: memref<1x128xf32, #tpu.memory_space<vmem>>, %arg8: memref<8x128xf32, #tpu.memory_space<vmem>>) attributes {dimension_semantics = [#tpu.dimension_semantics<parallel>], iteration_bounds = array<i64: 1>, scalar_prefetch = 0 : i64, scratch_operands = 0 : i64, tpu.core_type = #tpu.core_type<tc>, window_params = [{transform_indices = @transform_0, window_bounds = array<i64: 8, 4>}, {pipeline_mode = #tpu.pipeline_mode<synchronous>, transform_indices = @transform_1, window_bounds = array<i64: 4, 32>}, {pipeline_mode = #tpu.pipeline_mode<synchronous>, transform_indices = @transform_2, window_bounds = array<i64: 1, 32>}, {pipeline_mode = #tpu.pipeline_mode<synchronous>, transform_indices = @transform_3, window_bounds = array<i64: 2, 32, 32>}, {pipeline_mode = #tpu.pipeline_mode<synchronous>, transform_indices = @transform_4, window_bounds = array<i64: 2, 1, 32>}, {pipeline_mode = #tpu.pipeline_mode<synchronous>, transform_indices = @transform_5, window_bounds = array<i64: 32, 128>}, {pipeline_mode = #tpu.pipeline_mode<synchronous>, transform_indices = @transform_6, window_bounds = array<i64: 1, 128>}, {transform_indices = @transform_7, window_bounds = array<i64: 8, 128>}]} {
    %c0 = arith.constant 0 : index
    %c0_0 = arith.constant 0 : index
    %0 = vector.load %arg1[%c0, %c0_0] : memref<8x4xf32, #tpu.memory_space<vmem>>, vector<8x4xf32>
    %c0_1 = arith.constant 0 : index
    %c0_2 = arith.constant 0 : index
    %1 = vector.load %arg2[%c0_1, %c0_2] : memref<4x32xf32, #tpu.memory_space<vmem>>, vector<4x32xf32>
    %cst = arith.constant dense<0.000000e+00> : vector<8x32xf32>
    %2 = tpu.matmul %0, %1, %cst {dimension_numbers = #tpu.dot_dimension_numbers<[1], [0], [0], [1], [0, 0, 1, 1], [], []>} : vector<8x4xf32>, vector<4x32xf32>, vector<8x32xf32> -> vector<8x32xf32>
    %c0_3 = arith.constant 0 : index
    %c0_4 = arith.constant 0 : index
    %3 = vector.load %arg3[%c0_3, %c0_4] : memref<1x32xf32, #tpu.memory_space<vmem>>, vector<1x32xf32>
    %4 = vector.broadcast %3 : vector<1x32xf32> to vector<8x32xf32>
    %5 = arith.addf %2, %4 : vector<8x32xf32>
    %cst_5 = arith.constant 0.000000e+00 : f32
    %6 = vector.broadcast %cst_5 : f32 to vector<8x32xf32>
    %7 = arith.maximumf %5, %6 : vector<8x32xf32>
    %c0_6 = arith.constant 0 : index
    %c0_7 = arith.constant 0 : index
    %c0_8 = arith.constant 0 : index
    %8 = vector.load %arg4[%c0_6, %c0_7, %c0_8] : memref<2x32x32xf32, #tpu.memory_space<vmem>>, vector<1x32x32xf32>
    %9 = vector.shape_cast %8 : vector<1x32x32xf32> to vector<32x32xf32>
    %cst_9 = arith.constant dense<0.000000e+00> : vector<8x32xf32>
    %10 = tpu.matmul %7, %9, %cst_9 {dimension_numbers = #tpu.dot_dimension_numbers<[1], [0], [0], [1], [0, 0, 1, 1], [], []>} : vector<8x32xf32>, vector<32x32xf32>, vector<8x32xf32> -> vector<8x32xf32>
    %c0_10 = arith.constant 0 : index
    %c0_11 = arith.constant 0 : index
    %c0_12 = arith.constant 0 : index
    %11 = vector.load %arg5[%c0_10, %c0_11, %c0_12] : memref<2x1x32xf32, #tpu.memory_space<vmem>>, vector<1x1x32xf32>
    %12 = vector.shape_cast %11 : vector<1x1x32xf32> to vector<1x32xf32>
    %13 = vector.broadcast %12 : vector<1x32xf32> to vector<8x32xf32>
    %14 = arith.addf %10, %13 : vector<8x32xf32>
    %cst_13 = arith.constant 0.000000e+00 : f32
    %15 = vector.broadcast %cst_13 : f32 to vector<8x32xf32>
    %16 = arith.maximumf %14, %15 : vector<8x32xf32>
    %c1 = arith.constant 1 : index
    %c0_14 = arith.constant 0 : index
    %c0_15 = arith.constant 0 : index
    %17 = vector.load %arg4[%c1, %c0_14, %c0_15] : memref<2x32x32xf32, #tpu.memory_space<vmem>>, vector<1x32x32xf32>
    %18 = vector.shape_cast %17 : vector<1x32x32xf32> to vector<32x32xf32>
    %cst_16 = arith.constant dense<0.000000e+00> : vector<8x32xf32>
    %19 = tpu.matmul %16, %18, %cst_16 {dimension_numbers = #tpu.dot_dimension_numbers<[1], [0], [0], [1], [0, 0, 1, 1], [], []>} : vector<8x32xf32>, vector<32x32xf32>, vector<8x32xf32> -> vector<8x32xf32>
    %c1_17 = arith.constant 1 : index
    %c0_18 = arith.constant 0 : index
    %c0_19 = arith.constant 0 : index
    %20 = vector.load %arg5[%c1_17, %c0_18, %c0_19] : memref<2x1x32xf32, #tpu.memory_space<vmem>>, vector<1x1x32xf32>
    %21 = vector.shape_cast %20 : vector<1x1x32xf32> to vector<1x32xf32>
    %22 = vector.broadcast %21 : vector<1x32xf32> to vector<8x32xf32>
    %23 = arith.addf %19, %22 : vector<8x32xf32>
    %cst_20 = arith.constant 0.000000e+00 : f32
    %24 = vector.broadcast %cst_20 : f32 to vector<8x32xf32>
    %25 = arith.maximumf %23, %24 : vector<8x32xf32>
    %c0_21 = arith.constant 0 : index
    %c0_22 = arith.constant 0 : index
    %26 = vector.load %arg6[%c0_21, %c0_22] : memref<32x128xf32, #tpu.memory_space<vmem>>, vector<32x128xf32>
    %cst_23 = arith.constant dense<0.000000e+00> : vector<8x128xf32>
    %27 = tpu.matmul %25, %26, %cst_23 {dimension_numbers = #tpu.dot_dimension_numbers<[1], [0], [0], [1], [0, 0, 1, 1], [], []>} : vector<8x32xf32>, vector<32x128xf32>, vector<8x128xf32> -> vector<8x128xf32>
    %c0_24 = arith.constant 0 : index
    %c0_25 = arith.constant 0 : index
    %28 = vector.load %arg7[%c0_24, %c0_25] : memref<1x128xf32, #tpu.memory_space<vmem>>, vector<1x128xf32>
    %29 = vector.broadcast %28 : vector<1x128xf32> to vector<8x128xf32>
    %30 = arith.addf %27, %29 : vector<8x128xf32>
    %c0_26 = arith.constant 0 : index
    %c0_27 = arith.constant 0 : index
    %31 = vector.load %arg8[%c0_26, %c0_27] : memref<8x128xf32, #tpu.memory_space<vmem>>, vector<8x128xf32>
    tpu.vector_store %arg8[%c0_26, %c0_27], %30 {strides = array<i32>} : memref<8x128xf32, #tpu.memory_space<vmem>>, vector<8x128xf32>,
    return
  }
  func.func @transform_0(%arg0: i32) -> (i32, i32) {
    %c0_i32 = arith.constant 0 : i32
    %c0_i32_0 = arith.constant 0 : i32
    return %arg0, %c0_i32 : i32, i32
  }
  func.func @transform_1(%arg0: i32) -> (i32, i32) {
    %c0_i32 = arith.constant 0 : i32
    %c0_i32_0 = arith.constant 0 : i32
    %c0_i32_1 = arith.constant 0 : i32
    return %c0_i32, %c0_i32_0 : i32, i32
  }
  func.func @transform_2(%arg0: i32) -> (i32, i32) {
    %c0_i32 = arith.constant 0 : i32
    %c0_i32_0 = arith.constant 0 : i32
    %c0_i32_1 = arith.constant 0 : i32
    return %c0_i32, %c0_i32_0 : i32, i32
  }
  func.func @transform_3(%arg0: i32) -> (i32, i32, i32) {
    %c0_i32 = arith.constant 0 : i32
    %c0_i32_0 = arith.constant 0 : i32
    %c0_i32_1 = arith.constant 0 : i32
    %c0_i32_2 = arith.constant 0 : i32
    return %c0_i32, %c0_i32_0, %c0_i32_1 : i32, i32, i32
  }
  func.func @transform_4(%arg0: i32) -> (i32, i32, i32) {
    %c0_i32 = arith.constant 0 : i32
    %c0_i32_0 = arith.constant 0 : i32
    %c0_i32_1 = arith.constant 0 : i32
    %c0_i32_2 = arith.constant 0 : i32
    return %c0_i32, %c0_i32_0, %c0_i32_1 : i32, i32, i32
  }
  func.func @transform_5(%arg0: i32) -> (i32, i32) {
    %c0_i32 = arith.constant 0 : i32
    %c0_i32_0 = arith.constant 0 : i32
    %c0_i32_1 = arith.constant 0 : i32
    return %c0_i32, %c0_i32_0 : i32, i32
  }
  func.func @transform_6(%arg0: i32) -> (i32, i32) {
    %c0_i32 = arith.constant 0 : i32
    %c0_i32_0 = arith.constant 0 : i32
    %c0_i32_1 = arith.constant 0 : i32
    return %c0_i32, %c0_i32_0 : i32, i32
  }
  func.func @transform_7(%arg0: i32) -> (i32, i32) {
    %c0_i32 = arith.constant 0 : i32
    %c0_i32_0 = arith.constant 0 : i32
    return %arg0, %c0_i32 : i32, i32
  }
}

</mosaic_0001>

<llo_original>
// kernel: tpu_custom_call.1
$region0: #{tpu_custom_call.1}
  #allocation0 [shape = 'u32[]', space=smem, size = 0x4, offset = 0x4, fixed_abs, tag = 'smem constant byte address 0x4 - core index']
  #allocation1 [shape = 'u32[144,128]{1,0:T(1,128)}', space=vmem, size = 0x12000, scoped, tag = 'internal scratch']
  %s0 = inlined_call_operand.vmem [shape: f32[8,4], index: 0, kind: input, shape index: {}]
  %s1 = inlined_call_operand.vmem [shape: f32[4,32], index: 1, kind: input, shape index: {}]
  %s2 = inlined_call_operand.vmem [shape: f32[1,32], index: 2, kind: input, shape index: {}]
  %s3 = inlined_call_operand.hbm [shape: f32[2,32,32], index: 3, kind: input, shape index: {}]
  %s4 = inlined_call_operand.vmem [shape: f32[2,1,32], index: 4, kind: input, shape index: {}]
  %s5 = inlined_call_operand.hbm [shape: f32[32,128], index: 5, kind: input, shape index: {}]
  %s6 = inlined_call_operand.vmem [shape: f32[1,128], index: 6, kind: input, shape index: {}]
  %s7 = inlined_call_operand.hbm [shape: f32[8,128], index: 7, kind: output, shape index: {}]
  %s8 = sld [smem:[#allocation0]]
  $region46: #{tpu_custom_call.1} parent=0
    _
  %s10 = ssub.s32 1, %s8
  %s11 = scalar_select 0, %s10, %s8
  $region1: #{tpu_custom_call.1} parent=0
    #allocation2 [shape = 'u8[32768]{0}', space=vmem, size = 0x8000, scoped, tag = 'input window, operand 3, single buffered']
    #allocation3 [shape = 's32[1]{0}', space=sflag, size = 0x4, scoped, tag = 'scoped memory for tpu_custom_call.1']
    #allocation4 [shape = 's32[1]{0}', space=sflag, size = 0x4, scoped, tag = 'scoped memory for tpu_custom_call.1']
    #allocation5 [shape = 'u8[16384]{0}', space=vmem, size = 0x4000, scoped, tag = 'input window, operand 5, single buffered']
    #allocation6 [shape = 's32[1]{0}', space=sflag, size = 0x4, scoped, tag = 'scoped memory for tpu_custom_call.1']
    #allocation7 [shape = 'u8[4096]{0}', space=vmem, size = 0x1000, scoped, tag = 'output window, operand 0, single buffered']
    %12 = vsyncpa [#allocation3], 0
    %13 = vsyncpa [#allocation6], 0
    %14 = vsyncpa [#allocation4], 0
    // Predicated region
    $region2: #{tpu_custom_call.1} parent=1 // pred_check
      _
    $region3: #{tpu_custom_call.1} parent=1 // pred_check_branch
      %16 = sbr.rel (0) target = $region5
    $region4: #{tpu_custom_call.1} parent=1 // pred_region
      _
    $region5: #{tpu_custom_call.1} parent=1 // pred_fallthru
      _
    // Predicated region
    $region6: #{tpu_custom_call.1} parent=1 // pred_check
      _
    $region7: #{tpu_custom_call.1} parent=1 // pred_check_branch
      %18 = sbr.rel (0) target = $region9
    $region8: #{tpu_custom_call.1} parent=1 // pred_region
      _
    $region9: #{tpu_custom_call.1} parent=1 // pred_fallthru
      _
    // Predicated region
    $region10: #{tpu_custom_call.1} parent=1 // pred_check
      _
    $region11: #{tpu_custom_call.1} parent=1 // pred_check_branch
      %20 = sbr.rel (0) target = $region13
    $region12: #{tpu_custom_call.1} parent=1 // pred_region
      _
    $region13: #{tpu_custom_call.1} parent=1 // pred_fallthru
      _
    // Predicated region
    $region14: #{tpu_custom_call.1} parent=1 // pred_check
      _
    $region15: #{tpu_custom_call.1} parent=1 // pred_check_branch
      %22 = sbr.rel (0) target = $region17
    $region16: #{tpu_custom_call.1} parent=1 // pred_region
      %s24 = ssub.s32 1024, 1024
      %25 = vsyncadd [#allocation3], %s24
      %s26 = sshll.u32 [#allocation2], 4
      %s27 = int_to_ptr.vmem [resolvable:$true] %s26
      %32 = dma.hbm_to_vmem [thread:$0]  %s3, 1024, %s27, [#allocation3], 128, 128, 8
    $region17: #{tpu_custom_call.1} parent=1 // pred_fallthru
      _
    // Predicated region
    $region18: #{tpu_custom_call.1} parent=1 // pred_check
      _
    $region19: #{tpu_custom_call.1} parent=1 // pred_check_branch
      %34 = sbr.rel (0) target = $region21
    $region20: #{tpu_custom_call.1} parent=1 // pred_region
      _
    $region21: #{tpu_custom_call.1} parent=1 // pred_fallthru
      _
    // Predicated region
    $region22: #{tpu_custom_call.1} parent=1 // pred_check
      _
    $region23: #{tpu_custom_call.1} parent=1 // pred_check_branch
      %36 = sbr.rel (0) target = $region25
    $region24: #{tpu_custom_call.1} parent=1 // pred_region
      %s38 = ssub.s32 512, 512
      %39 = vsyncadd [#allocation6], %s38
      %s40 = sshll.u32 [#allocation5], 4
      %s41 = int_to_ptr.vmem [resolvable:$true] %s40
      %46 = dma.hbm_to_vmem [thread:$0]  %s5, 512, %s41, [#allocation6], 128, 128, 8
    $region25: #{tpu_custom_call.1} parent=1 // pred_fallthru
      _
    // Predicated region
    $region26: #{tpu_custom_call.1} parent=1 // pred_check
      _
    $region27: #{tpu_custom_call.1} parent=1 // pred_check_branch
      %48 = sbr.rel (0) target = $region29
    $region28: #{tpu_custom_call.1} parent=1 // pred_region
      _
    $region29: #{tpu_custom_call.1} parent=1 // pred_fallthru
      _
    // Predicated region
    $region30: #{tpu_custom_call.1} parent=1 // pred_check
      _
    $region31: #{tpu_custom_call.1} parent=1 // pred_check_branch
      %50 = sbr.rel (0) target = $region33
    $region32: #{tpu_custom_call.1} parent=1 // pred_region
      %51 = dma.done [#allocation3], 1024
    $region33: #{tpu_custom_call.1} parent=1 // pred_fallthru
      _
    // Predicated region
    $region34: #{tpu_custom_call.1} parent=1 // pred_check
      _
    $region35: #{tpu_custom_call.1} parent=1 // pred_check_branch
      %53 = sbr.rel (0) target = $region37
    $region36: #{tpu_custom_call.1} parent=1 // pred_region
      %54 = dma.done [#allocation6], 512
    $region37: #{tpu_custom_call.1} parent=1 // pred_fallthru
      _
    %v55 = vld [vmem:[%s0] sm:$0xff]
    %v56 = vld [vmem:[%s1] sm:$0xf]
    %v57 = vld [vmem:[%s2] sm:$0x1]
    %v59 = vlaneseq
    %v60 = vshrl.u32 %v59, 7
    %v61 = vsub.s32 0, %v60
    %v62 = vrot.slane %v57, %v61
    %vm64 = vcmask 31744
    %v66 = vsel %vm64, %v55, 0
    %vm68 = vcmask 1043456
    %v70 = vsel %vm68, %v56, 0
    %72 = vmatprep.subr.mxu0 0.0
    %73 = vmatpush1.msra.mxu0 %v70
    %74 = vmatprep.subr.mxu0 0.0
    %75 = vmatpush1.msra.mxu0 0.0
    %76 = vmatprep.subr.mxu0 0.0
    %77 = vmatpush1.msra.mxu0 0.0
    %78 = vmatprep.subr.mxu0 0.0
    %79 = vmatpush1.msra.mxu0 0.0
    %80 = vmatprep.subr.mxu0 0.0
    %81 = vmatpush1.msra.mxu0 0.0
    %82 = vmatprep.subr.mxu0 0.0
    %83 = vmatpush1.msra.mxu0 0.0
    %84 = vmatprep.subr.mxu0 0.0
    %85 = vmatpush1.msra.mxu0 0.0
    %86 = vmatprep.subr.mxu0 0.0
    %87 = vmatpush1.msra.mxu0 0.0
    %88 = vmatprep.subr.mxu0 0.0
    %89 = vmatpush1.msra.mxu0 0.0
    %90 = vmatprep.subr.mxu0 0.0
    %91 = vmatpush1.msra.mxu0 0.0
    %92 = vmatprep.subr.mxu0 0.0
    %93 = vmatpush1.msra.mxu0 0.0
    %94 = vmatprep.subr.mxu0 0.0
    %95 = vmatpush1.msra.mxu0 0.0
    %96 = vmatprep.subr.mxu0 0.0
    %97 = vmatpush1.msra.mxu0 0.0
    %98 = vmatprep.subr.mxu0 0.0
    %99 = vmatpush1.msra.mxu0 0.0
    %100 = vmatprep.subr.mxu0 0.0
    %101 = vmatpush1.msra.mxu0 0.0
    %102 = vmatprep.subr.mxu0 0.0
    %103 = vmatpush1.msra.mxu0 0.0
    %104 = vmatprep.subr.mxu0 0.0
    %105 = vmatpush1.msra.mxu0 0.0
    %106 = vmatprep.subr.mxu0 0.0
    %107 = vmatpush1.msra.mxu0 0.0
    %108 = vmatprep.subr.mxu0 0.0
    %109 = vmatpush1.msra.mxu0 0.0
    %110 = vmatprep.subr.mxu0 0.0
    %111 = vmatpush1.msra.mxu0 0.0
    %112 = vmatprep.subr.mxu0 0.0
    %113 = vmatpush1.msra.mxu0 0.0
    %114 = vmatprep.subr.mxu0 0.0
    %115 = vmatpush1.msra.mxu0 0.0
    %116 = vmatprep.subr.mxu0 0.0
    %117 = vmatpush1.msra.mxu0 0.0
    %118 = vmatprep.subr.mxu0 0.0
    %119 = vmatpush1.msra.mxu0 0.0
    %120 = vmatprep.subr.mxu0 0.0
    %121 = vmatpush1.msra.mxu0 0.0
    %122 = vmatprep.subr.mxu0 0.0
    %123 = vmatpush1.msra.mxu0 0.0
    %124 = vmatprep.subr.mxu0 0.0
    %125 = vmatpush1.msra.mxu0 0.0
    %126 = vmatprep.subr.mxu0 0.0
    %127 = vmatpush1.msra.mxu0 0.0
    %128 = vmatprep.subr.mxu0 0.0
    %129 = vmatpush1.msra.mxu0 0.0
    %130 = vmatprep.subr.mxu0 0.0
    %131 = vmatpush1.msra.mxu0 0.0
    %132 = vmatprep.subr.mxu0 0.0
    %133 = vmatpush1.msra.mxu0 0.0
    %134 = vmatprep.subr.mxu0 0.0
    %135 = vmatpush1.msra.mxu0 0.0
    %136 = vmatprep.mubr.f32.mxu0 0.0
    %137 = vmatmul.mubr.f32.gmra.mrb[0].mxu0 %v66
    %v138 = vpop.f32.mrb[0].mxu0
    %v139 = vadd.f32 %v62, %v138
    %v140 = vpop.f32.mrb[0].mxu0
    %141 = vdwg.mxu0
    %v142 = vmax.f32 %v139, 0.0
    %v143 = vld [vmem:[#allocation2] sm:$0xff]
    %v144 = vld [vmem:[#allocation2 + $0x8] sm:$0xff]
    %v145 = vld [vmem:[#allocation2 + $0x10] sm:$0xff]
    %v146 = vld [vmem:[#allocation2 + $0x18] sm:$0xff]
    %v147 = vld [vmem:[%s4] sm:$0x1]
    %v149 = vlaneseq
    %v150 = vshrl.u32 %v149, 7
    %v151 = vsub.s32 0, %v150
    %v152 = vrot.slane %v147, %v151
    %vm154 = vcmask 261120
    %v156 = vsel %vm154, %v142, 0
    %158 = vmatprep.subr.mxu0 0.0
    %159 = vmatpush1.msra.mxu0 %v143
    %160 = vmatprep.subr.mxu0 0.0
    %161 = vmatpush1.msra.mxu0 %v144
    %162 = vmatprep.subr.mxu0 0.0
    %163 = vmatpush1.msra.mxu0 %v145
    %164 = vmatprep.subr.mxu0 0.0
    %165 = vmatpush1.msra.mxu0 %v146
    %166 = vmatprep.subr.mxu0 0.0
    %167 = vmatpush1.msra.mxu0 0.0
    %168 = vmatprep.subr.mxu0 0.0
    %169 = vmatpush1.msra.mxu0 0.0
    %170 = vmatprep.subr.mxu0 0.0
    %171 = vmatpush1.msra.mxu0 0.0
    %172 = vmatprep.subr.mxu0 0.0
    %173 = vmatpush1.msra.mxu0 0.0
    %174 = vmatprep.subr.mxu0 0.0
    %175 = vmatpush1.msra.mxu0 0.0
    %176 = vmatprep.subr.mxu0 0.0
    %177 = vmatpush1.msra.mxu0 0.0
    %178 = vmatprep.subr.mxu0 0.0
    %179 = vmatpush1.msra.mxu0 0.0
    %180 = vmatprep.subr.mxu0 0.0
    %181 = vmatpush1.msra.mxu0 0.0
    %182 = vmatprep.subr.mxu0 0.0
    %183 = vmatpush1.msra.mxu0 0.0
    %184 = vmatprep.subr.mxu0 0.0
    %185 = vmatpush1.msra.mxu0 0.0
    %186 = vmatprep.subr.mxu0 0.0
    %187 = vmatpush1.msra.mxu0 0.0
    %188 = vmatprep.subr.mxu0 0.0
    %189 = vmatpush1.msra.mxu0 0.0
    %190 = vmatprep.subr.mxu0 0.0
    %191 = vmatpush1.msra.mxu0 0.0
    %192 = vmatprep.subr.mxu0 0.0
    %193 = vmatpush1.msra.mxu0 0.0
    %194 = vmatprep.subr.mxu0 0.0
    %195 = vmatpush1.msra.mxu0 0.0
    %196 = vmatprep.subr.mxu0 0.0
    %197 = vmatpush1.msra.mxu0 0.0
    %198 = vmatprep.subr.mxu0 0.0
    %199 = vmatpush1.msra.mxu0 0.0
    %200 = vmatprep.subr.mxu0 0.0
    %201 = vmatpush1.msra.mxu0 0.0
    %202 = vmatprep.subr.mxu0 0.0
    %203 = vmatpush1.msra.mxu0 0.0
    %204 = vmatprep.subr.mxu0 0.0
    %205 = vmatpush1.msra.mxu0 0.0
    %206 = vmatprep.subr.mxu0 0.0
    %207 = vmatpush1.msra.mxu0 0.0
    %208 = vmatprep.subr.mxu0 0.0
    %209 = vmatpush1.msra.mxu0 0.0
    %210 = vmatprep.subr.mxu0 0.0
    %211 = vmatpush1.msra.mxu0 0.0
    %212 = vmatprep.subr.mxu0 0.0
    %213 = vmatpush1.msra.mxu0 0.0
    %214 = vmatprep.subr.mxu0 0.0
    %215 = vmatpush1.msra.mxu0 0.0
    %216 = vmatprep.subr.mxu0 0.0
    %217 = vmatpush1.msra.mxu0 0.0
    %218 = vmatprep.subr.mxu0 0.0
    %219 = vmatpush1.msra.mxu0 0.0
    %220 = vmatprep.subr.mxu0 0.0
    %221 = vmatpush1.msra.mxu0 0.0
    %222 = vmatprep.mubr.f32.mxu0 0.0
    %223 = vmatmul.mubr.f32.gmra.mrb[0].mxu0 %v156
    %v224 = vpop.f32.mrb[0].mxu0
    %v225 = vadd.f32 %v152, %v224
    %v226 = vpop.f32.mrb[0].mxu0
    %227 = vdwg.mxu0
    %v228 = vmax.f32 %v225, 0.0
    %s229 = scalar_lea.vmem [#allocation2], 32
    %v230 = vld [vmem:[%s229] sm:$0xff]
    %v231 = vld [vmem:[%s229 + $0x8] sm:$0xff]
    %v232 = vld [vmem:[%s229 + $0x10] sm:$0xff]
    %v233 = vld [vmem:[%s229 + $0x18] sm:$0xff]
    %s234 = scalar_lea.vmem %s4, 1
    %v235 = vld [vmem:[%s234] sm:$0x1]
    %v237 = vlaneseq
    %v238 = vshrl.u32 %v237, 7
    %v239 = vsub.s32 0, %v238
    %v240 = vrot.slane %v235, %v239
    %v243 = vsel %vm154, %v228, 0
    %245 = vmatprep.subr.mxu0 0.0
    %246 = vmatpush1.msra.mxu0 %v230
    %247 = vmatprep.subr.mxu0 0.0
    %248 = vmatpush1.msra.mxu0 %v231
    %249 = vmatprep.subr.mxu0 0.0
    %250 = vmatpush1.msra.mxu0 %v232
    %251 = vmatprep.subr.mxu0 0.0
    %252 = vmatpush1.msra.mxu0 %v233
    %253 = vmatprep.subr.mxu0 0.0
    %254 = vmatpush1.msra.mxu0 0.0
    %255 = vmatprep.subr.mxu0 0.0
    %256 = vmatpush1.msra.mxu0 0.0
    %257 = vmatprep.subr.mxu0 0.0
    %258 = vmatpush1.msra.mxu0 0.0
    %259 = vmatprep.subr.mxu0 0.0
    %260 = vmatpush1.msra.mxu0 0.0
    %261 = vmatprep.subr.mxu0 0.0
    %262 = vmatpush1.msra.mxu0 0.0
    %263 = vmatprep.subr.mxu0 0.0
    %264 = vmatpush1.msra.mxu0 0.0
    %265 = vmatprep.subr.mxu0 0.0
    %266 = vmatpush1.msra.mxu0 0.0
    %267 = vmatprep.subr.mxu0 0.0
    %268 = vmatpush1.msra.mxu0 0.0
    %269 = vmatprep.subr.mxu0 0.0
    %270 = vmatpush1.msra.mxu0 0.0
    %271 = vmatprep.subr.mxu0 0.0
    %272 = vmatpush1.msra.mxu0 0.0
    %273 = vmatprep.subr.mxu0 0.0
    %274 = vmatpush1.msra.mxu0 0.0
    %275 = vmatprep.subr.mxu0 0.0
    %276 = vmatpush1.msra.mxu0 0.0
    %277 = vmatprep.subr.mxu0 0.0
    %278 = vmatpush1.msra.mxu0 0.0
    %279 = vmatprep.subr.mxu0 0.0
    %280 = vmatpush1.msra.mxu0 0.0
    %281 = vmatprep.subr.mxu0 0.0
    %282 = vmatpush1.msra.mxu0 0.0
    %283 = vmatprep.subr.mxu0 0.0
    %284 = vmatpush1.msra.mxu0 0.0
    %285 = vmatprep.subr.mxu0 0.0
    %286 = vmatpush1.msra.mxu0 0.0
    %287 = vmatprep.subr.mxu0 0.0
    %288 = vmatpush1.msra.mxu0 0.0
    %289 = vmatprep.subr.mxu0 0.0
    %290 = vmatpush1.msra.mxu0 0.0
    %291 = vmatprep.subr.mxu0 0.0
    %292 = vmatpush1.msra.mxu0 0.0
    %293 = vmatprep.subr.mxu0 0.0
    %294 = vmatpush1.msra.mxu0 0.0
    %295 = vmatprep.subr.mxu0 0.0
    %296 = vmatpush1.msra.mxu0 0.0
    %297 = vmatprep.subr.mxu0 0.0
    %298 = vmatpush1.msra.mxu0 0.0
    %299 = vmatprep.subr.mxu0 0.0
    %300 = vmatpush1.msra.mxu0 0.0
    %301 = vmatprep.subr.mxu0 0.0
    %302 = vmatpush1.msra.mxu0 0.0
    %303 = vmatprep.subr.mxu0 0.0
    %304 = vmatpush1.msra.mxu0 0.0
    %305 = vmatprep.subr.mxu0 0.0
    %306 = vmatpush1.msra.mxu0 0.0
    %307 = vmatprep.subr.mxu0 0.0
    %308 = vmatpush1.msra.mxu0 0.0
    %309 = vmatprep.mubr.f32.mxu0 0.0
    %310 = vmatmul.mubr.f32.gmra.mrb[0].mxu0 %v243
    %v311 = vpop.f32.mrb[0].mxu0
    %v312 = vadd.f32 %v240, %v311
    %v313 = vpop.f32.mrb[0].mxu0
    %314 = vdwg.mxu0
    %v315 = vmax.f32 %v312, 0.0
    %v316 = vld [vmem:[#allocation5] sm:$0xff]
    %v317 = vld [vmem:[#allocation5 + $0x8] sm:$0xff]
    %v318 = vld [vmem:[#allocation5 + $0x10] sm:$0xff]
    %v319 = vld [vmem:[#allocation5 + $0x18] sm:$0xff]
    %v320 = vld [vmem:[%s6] sm:$0x1]
    %v322 = vlaneseq
    %v323 = vshrl.u32 %v322, 7
    %v324 = vsub.s32 0, %v323
    %v325 = vrot.slane %v320, %v324
    %v328 = vsel %vm154, %v315, 0
    %330 = vmatprep.subr.mxu0 0.0
    %331 = vmatpush1.msra.mxu0 %v316
    %332 = vmatprep.subr.mxu0 0.0
    %333 = vmatpush1.msra.mxu0 %v317
    %334 = vmatprep.subr.mxu0 0.0
    %335 = vmatpush1.msra.mxu0 %v318
    %336 = vmatprep.subr.mxu0 0.0
    %337 = vmatpush1.msra.mxu0 %v319
    %338 = vmatprep.subr.mxu0 0.0
    %339 = vmatpush1.msra.mxu0 0.0
    %340 = vmatprep.subr.mxu0 0.0
    %341 = vmatpush1.msra.mxu0 0.0
    %342 = vmatprep.subr.mxu0 0.0
    %343 = vmatpush1.msra.mxu0 0.0
    %344 = vmatprep.subr.mxu0 0.0
    %345 = vmatpush1.msra.mxu0 0.0
    %346 = vmatprep.subr.mxu0 0.0
    %347 = vmatpush1.msra.mxu0 0.0
    %348 = vmatprep.subr.mxu0 0.0
    %349 = vmatpush1.msra.mxu0 0.0
    %350 = vmatprep.subr.mxu0 0.0
    %351 = vmatpush1.msra.mxu0 0.0
    %352 = vmatprep.subr.mxu0 0.0
    %353 = vmatpush1.msra.mxu0 0.0
    %354 = vmatprep.subr.mxu0 0.0
    %355 = vmatpush1.msra.mxu0 0.0
    %356 = vmatprep.subr.mxu0 0.0
    %357 = vmatpush1.msra.mxu0 0.0
    %358 = vmatprep.subr.mxu0 0.0
    %359 = vmatpush1.msra.mxu0 0.0
    %360 = vmatprep.subr.mxu0 0.0
    %361 = vmatpush1.msra.mxu0 0.0
    %362 = vmatprep.subr.mxu0 0.0
    %363 = vmatpush1.msra.mxu0 0.0
    %364 = vmatprep.subr.mxu0 0.0
    %365 = vmatpush1.msra.mxu0 0.0
    %366 = vmatprep.subr.mxu0 0.0
    %367 = vmatpush1.msra.mxu0 0.0
    %368 = vmatprep.subr.mxu0 0.0
    %369 = vmatpush1.msra.mxu0 0.0
    %370 = vmatprep.subr.mxu0 0.0
    %371 = vmatpush1.msra.mxu0 0.0
    %372 = vmatprep.subr.mxu0 0.0
    %373 = vmatpush1.msra.mxu0 0.0
    %374 = vmatprep.subr.mxu0 0.0
    %375 = vmatpush1.msra.mxu0 0.0
    %376 = vmatprep.subr.mxu0 0.0
    %377 = vmatpush1.msra.mxu0 0.0
    %378 = vmatprep.subr.mxu0 0.0
    %379 = vmatpush1.msra.mxu0 0.0
    %380 = vmatprep.subr.mxu0 0.0
    %381 = vmatpush1.msra.mxu0 0.0
    %382 = vmatprep.subr.mxu0 0.0
    %383 = vmatpush1.msra.mxu0 0.0
    %384 = vmatprep.subr.mxu0 0.0
    %385 = vmatpush1.msra.mxu0 0.0
    %386 = vmatprep.subr.mxu0 0.0
    %387 = vmatpush1.msra.mxu0 0.0
    %388 = vmatprep.subr.mxu0 0.0
    %389 = vmatpush1.msra.mxu0 0.0
    %390 = vmatprep.subr.mxu0 0.0
    %391 = vmatpush1.msra.mxu0 0.0
    %392 = vmatprep.subr.mxu0 0.0
    %393 = vmatpush1.msra.mxu0 0.0
    %394 = vmatprep.mubr.f32.mxu0 0.0
    %395 = vmatmul.mubr.f32.gmra.mrb[0].mxu0 %v328
    %v396 = vpop.f32.mrb[0].mxu0
    %v397 = vadd.f32 %v325, %v396
    %v398 = vpop.f32.mrb[0].mxu0
    %399 = vdwg.mxu0
    %400 = vst [vmem:[#allocation7] sm:$0xff] %v397
    // Predicated region
    $region38: #{tpu_custom_call.1} parent=1 // pred_check
      _
    $region39: #{tpu_custom_call.1} parent=1 // pred_check_branch
      %402 = sbr.rel (0) target = $region41
    $region40: #{tpu_custom_call.1} parent=1 // pred_region
      %s404 = ssub.s32 128, 128
      %405 = vsyncadd [#allocation4], %s404
      %s407 = sshll.u32 [#allocation7], 4
      %s408 = int_to_ptr.vmem [resolvable:$true] %s407
      %410 = dma.vmem_to_hbm [thread:$0]  %s408, 128, %s7, [#allocation4]
    $region41: #{tpu_custom_call.1} parent=1 // pred_fallthru
      _
    // Predicated region
    $region42: #{tpu_custom_call.1} parent=1 // pred_check
      _
    $region43: #{tpu_custom_call.1} parent=1 // pred_check_branch
      %412 = sbr.rel (0) target = $region45
    $region44: #{tpu_custom_call.1} parent=1 // pred_region
      %413 = dma.done [#allocation4], 128
    $region45: #{tpu_custom_call.1} parent=1 // pred_fallthru
      _
    %414 = vsyncpa [#allocation3], 1
    %415 = vsyncpa [#allocation6], 1
    %416 = vsyncpa [#allocation4], 1

// kernel: tpu_custom_call.1
$region0: #{tpu_custom_call.1}
  #allocation0 [shape = 'u32[]', space=smem, size = 0x4, offset = 0x4, fixed_abs, tag = 'smem constant byte address 0x4 - core index']
  #allocation1 [shape = 'u32[144,128]{1,0:T(1,128)}', space=vmem, size = 0x12000, scoped, tag = 'internal scratch']
  %s0 = inlined_call_operand.vmem [shape: f32[8,4], index: 0, kind: input, shape index: {}]
  %s1 = inlined_call_operand.vmem [shape: f32[4,32], index: 1, kind: input, shape index: {}]
  %s2 = inlined_call_operand.vmem [shape: f32[1,32], index: 2, kind: input, shape index: {}]
  %s3 = inlined_call_operand.hbm [shape: f32[2,32,32], index: 3, kind: input, shape index: {}]
  %s4 = inlined_call_operand.vmem [shape: f32[2,1,32], index: 4, kind: input, shape index: {}]
  %s5 = inlined_call_operand.hbm [shape: f32[32,128], index: 5, kind: input, shape index: {}]
  %s6 = inlined_call_operand.vmem [shape: f32[1,128], index: 6, kind: input, shape index: {}]
  %s7 = inlined_call_operand.hbm [shape: f32[8,128], index: 7, kind: output, shape index: {}]
  %s8 = sld [smem:[#allocation0]]
  $region46: #{tpu_custom_call.1} parent=0
    _
  %s10 = ssub.s32 1, %s8
  %s11 = scalar_select 0, %s10, %s8
  $region1: #{tpu_custom_call.1} parent=0
    #allocation2 [shape = 'u8[32768]{0}', space=vmem, size = 0x8000, scoped, tag = 'input window, operand 3, single buffered']
    #allocation3 [shape = 's32[1]{0}', space=sflag, size = 0x4, scoped, tag = 'scoped memory for tpu_custom_call.1']
    #allocation4 [shape = 's32[1]{0}', space=sflag, size = 0x4, scoped, tag = 'scoped memory for tpu_custom_call.1']
    #allocation5 [shape = 'u8[16384]{0}', space=vmem, size = 0x4000, scoped, tag = 'input window, operand 5, single buffered']
    #allocation6 [shape = 's32[1]{0}', space=sflag, size = 0x4, scoped, tag = 'scoped memory for tpu_custom_call.1']
    #allocation7 [shape = 'u8[4096]{0}', space=vmem, size = 0x1000, scoped, tag = 'output window, operand 0, single buffered']
    %12 = vsyncpa [#allocation3], 0
    %13 = vsyncpa [#allocation6], 0
    %14 = vsyncpa [#allocation4], 0
    // Predicated region
    $region2: #{tpu_custom_call.1} parent=1 // pred_check
      _
    $region3: #{tpu_custom_call.1} parent=1 // pred_check_branch
      %16 = sbr.rel (0) target = $region5
    $region4: #{tpu_custom_call.1} parent=1 // pred_region
      _
    $region5: #{tpu_custom_call.1} parent=1 // pred_fallthru
      _
    // Predicated region
    $region6: #{tpu_custom_call.1} parent=1 // pred_check
      _
    $region7: #{tpu_custom_call.1} parent=1 // pred_check_branch
      %18 = sbr.rel (0) target = $region9
    $region8: #{tpu_custom_call.1} parent=1 // pred_region
      _
    $region9: #{tpu_custom_call.1} parent=1 // pred_fallthru
      _
    // Predicated region
    $region10: #{tpu_custom_call.1} parent=1 // pred_check
      _
    $region11: #{tpu_custom_call.1} parent=1 // pred_check_branch
      %20 = sbr.rel (0) target = $region13
    $region12: #{tpu_custom_call.1} parent=1 // pred_region
      _
    $region13: #{tpu_custom_call.1} parent=1 // pred_fallthru
      _
    // Predicated region
    $region14: #{tpu_custom_call.1} parent=1 // pred_check
      _
    $region15: #{tpu_custom_call.1} parent=1 // pred_check_branch
      %22 = sbr.rel (0) target = $region17
    $region16: #{tpu_custom_call.1} parent=1 // pred_region
      %s24 = ssub.s32 1024, 1024
      %25 = vsyncadd [#allocation3], %s24
      %s26 = sshll.u32 [#allocation2], 4
      %s27 = int_to_ptr.vmem [resolvable:$true] %s26
      %32 = dma.hbm_to_vmem [thread:$0]  %s3, 1024, %s27, [#allocation3], 128, 128, 8
    $region17: #{tpu_custom_call.1} parent=1 // pred_fallthru
      _
    // Predicated region
    $region18: #{tpu_custom_call.1} parent=1 // pred_check
      _
    $region19: #{tpu_custom_call.1} parent=1 // pred_check_branch
      %34 = sbr.rel (0) target = $region21
    $region20: #{tpu_custom_call.1} parent=1 // pred_region
      _
    $region21: #{tpu_custom_call.1} parent=1 // pred_fallthru
      _
    // Predicated region
    $region22: #{tpu_custom_call.1} parent=1 // pred_check
      _
    $region23: #{tpu_custom_call.1} parent=1 // pred_check_branch
      %36 = sbr.rel (0) target = $region25
    $region24: #{tpu_custom_call.1} parent=1 // pred_region
      %s38 = ssub.s32 512, 512
      %39 = vsyncadd [#allocation6], %s38
      %s40 = sshll.u32 [#allocation5], 4
      %s41 = int_to_ptr.vmem [resolvable:$true] %s40
      %46 = dma.hbm_to_vmem [thread:$0]  %s5, 512, %s41, [#allocation6], 128, 128, 8
    $region25: #{tpu_custom_call.1} parent=1 // pred_fallthru
      _
    // Predicated region
    $region26: #{tpu_custom_call.1} parent=1 // pred_check
      _
    $region27: #{tpu_custom_call.1} parent=1 // pred_check_branch
      %48 = sbr.rel (0) target = $region29
    $region28: #{tpu_custom_call.1} parent=1 // pred_region
      _
    $region29: #{tpu_custom_call.1} parent=1 // pred_fallthru
      _
    // Predicated region
    $region30: #{tpu_custom_call.1} parent=1 // pred_check
      _
    $region31: #{tpu_custom_call.1} parent=1 // pred_check_branch
      %50 = sbr.rel (0) target = $region33
    $region32: #{tpu_custom_call.1} parent=1 // pred_region
      %51 = dma.done [#allocation3], 1024
    $region33: #{tpu_custom_call.1} parent=1 // pred_fallthru
      _
    // Predicated region
    $region34: #{tpu_custom_call.1} parent=1 // pred_check
      _
    $region35: #{tpu_custom_call.1} parent=1 // pred_check_branch
      %53 = sbr.rel (0) target = $region37
    $region36: #{tpu_custom_call.1} parent=1 // pred_region
      %54 = dma.done [#allocation6], 512
    $region37: #{tpu_custom_call.1} parent=1 // pred_fallthru
      _
    %v55 = vld [vmem:[%s0] sm:$0xff]
    %v56 = vld [vmem:[%s1] sm:$0xf]
    %v57 = vld [vmem:[%s2] sm:$0x1]
    %v59 = vlaneseq
    %v60 = vshrl.u32 %v59, 7
    %v61 = vsub.s32 0, %v60
    %v62 = vrot.slane %v57, %v61
    %vm64 = vcmask 31744
    %v66 = vsel %vm64, %v55, 0
    %vm68 = vcmask 1043456
    %v70 = vsel %vm68, %v56, 0
    %72 = vmatprep.subr.mxu0 0.0
    %73 = vmatpush1.msra.mxu0 %v70
    %74 = vmatprep.subr.mxu0 0.0
    %75 = vmatpush1.msra.mxu0 0.0
    %76 = vmatprep.subr.mxu0 0.0
    %77 = vmatpush1.msra.mxu0 0.0
    %78 = vmatprep.subr.mxu0 0.0
    %79 = vmatpush1.msra.mxu0 0.0
    %80 = vmatprep.subr.mxu0 0.0
    %81 = vmatpush1.msra.mxu0 0.0
    %82 = vmatprep.subr.mxu0 0.0
    %83 = vmatpush1.msra.mxu0 0.0
    %84 = vmatprep.subr.mxu0 0.0
    %85 = vmatpush1.msra.mxu0 0.0
    %86 = vmatprep.subr.mxu0 0.0
    %87 = vmatpush1.msra.mxu0 0.0
    %88 = vmatprep.subr.mxu0 0.0
    %89 = vmatpush1.msra.mxu0 0.0
    %90 = vmatprep.subr.mxu0 0.0
    %91 = vmatpush1.msra.mxu0 0.0
    %92 = vmatprep.subr.mxu0 0.0
    %93 = vmatpush1.msra.mxu0 0.0
    %94 = vmatprep.subr.mxu0 0.0
    %95 = vmatpush1.msra.mxu0 0.0
    %96 = vmatprep.subr.mxu0 0.0
    %97 = vmatpush1.msra.mxu0 0.0
    %98 = vmatprep.subr.mxu0 0.0
    %99 = vmatpush1.msra.mxu0 0.0
    %100 = vmatprep.subr.mxu0 0.0
    %101 = vmatpush1.msra.mxu0 0.0
    %102 = vmatprep.subr.mxu0 0.0
    %103 = vmatpush1.msra.mxu0 0.0
    %104 = vmatprep.subr.mxu0 0.0
    %105 = vmatpush1.msra.mxu0 0.0
    %106 = vmatprep.subr.mxu0 0.0
    %107 = vmatpush1.msra.mxu0 0.0
    %108 = vmatprep.subr.mxu0 0.0
    %109 = vmatpush1.msra.mxu0 0.0
    %110 = vmatprep.subr.mxu0 0.0
    %111 = vmatpush1.msra.mxu0 0.0
    %112 = vmatprep.subr.mxu0 0.0
    %113 = vmatpush1.msra.mxu0 0.0
    %114 = vmatprep.subr.mxu0 0.0
    %115 = vmatpush1.msra.mxu0 0.0
    %116 = vmatprep.subr.mxu0 0.0
    %117 = vmatpush1.msra.mxu0 0.0
    %118 = vmatprep.subr.mxu0 0.0
    %119 = vmatpush1.msra.mxu0 0.0
    %120 = vmatprep.subr.mxu0 0.0
    %121 = vmatpush1.msra.mxu0 0.0
    %122 = vmatprep.subr.mxu0 0.0
    %123 = vmatpush1.msra.mxu0 0.0
    %124 = vmatprep.subr.mxu0 0.0
    %125 = vmatpush1.msra.mxu0 0.0
    %126 = vmatprep.subr.mxu0 0.0
    %127 = vmatpush1.msra.mxu0 0.0
    %128 = vmatprep.subr.mxu0 0.0
    %129 = vmatpush1.msra.mxu0 0.0
    %130 = vmatprep.subr.mxu0 0.0
    %131 = vmatpush1.msra.mxu0 0.0
    %132 = vmatprep.subr.mxu0 0.0
    %133 = vmatpush1.msra.mxu0 0.0
    %134 = vmatprep.subr.mxu0 0.0
    %135 = vmatpush1.msra.mxu0 0.0
    %136 = vmatprep.mubr.f32.mxu0 0.0
    %137 = vmatmul.mubr.f32.gmra.mrb[0].mxu0 %v66
    %v138 = vpop.f32.mrb[0].mxu0
    %v139 = vadd.f32 %v62, %v138
    %v140 = vpop.f32.mrb[0].mxu0
    %141 = vdwg.mxu0
    %v142 = vmax.f32 %v139, 0.0
    %v143 = vld [vmem:[#allocation2] sm:$0xff]
    %v144 = vld [vmem:[#allocation2 + $0x8] sm:$0xff]
    %v145 = vld [vmem:[#allocation2 + $0x10] sm:$0xff]
    %v146 = vld [vmem:[#allocation2 + $0x18] sm:$0xff]
    %v147 = vld [vmem:[%s4] sm:$0x1]
    %v149 = vlaneseq
    %v150 = vshrl.u32 %v149, 7
    %v151 = vsub.s32 0, %v150
    %v152 = vrot.slane %v147, %v151
    %vm154 = vcmask 261120
    %v156 = vsel %vm154, %v142, 0
    %158 = vmatprep.subr.mxu0 0.0
    %159 = vmatpush1.msra.mxu0 %v143
    %160 = vmatprep.subr.mxu0 0.0
    %161 = vmatpush1.msra.mxu0 %v144
    %162 = vmatprep.subr.mxu0 0.0
    %163 = vmatpush1.msra.mxu0 %v145
    %164 = vmatprep.subr.mxu0 0.0
    %165 = vmatpush1.msra.mxu0 %v146
    %166 = vmatprep.subr.mxu0 0.0
    %167 = vmatpush1.msra.mxu0 0.0
    %168 = vmatprep.subr.mxu0 0.0
    %169 = vmatpush1.msra.mxu0 0.0
    %170 = vmatprep.subr.mxu0 0.0
    %171 = vmatpush1.msra.mxu0 0.0
    %172 = vmatprep.subr.mxu0 0.0
    %173 = vmatpush1.msra.mxu0 0.0
    %174 = vmatprep.subr.mxu0 0.0
    %175 = vmatpush1.msra.mxu0 0.0
    %176 = vmatprep.subr.mxu0 0.0
    %177 = vmatpush1.msra.mxu0 0.0
    %178 = vmatprep.subr.mxu0 0.0
    %179 = vmatpush1.msra.mxu0 0.0
    %180 = vmatprep.subr.mxu0 0.0
    %181 = vmatpush1.msra.mxu0 0.0
    %182 = vmatprep.subr.mxu0 0.0
    %183 = vmatpush1.msra.mxu0 0.0
    %184 = vmatprep.subr.mxu0 0.0
    %185 = vmatpush1.msra.mxu0 0.0
    %186 = vmatprep.subr.mxu0 0.0
    %187 = vmatpush1.msra.mxu0 0.0
    %188 = vmatprep.subr.mxu0 0.0
    %189 = vmatpush1.msra.mxu0 0.0
    %190 = vmatprep.subr.mxu0 0.0
    %191 = vmatpush1.msra.mxu0 0.0
    %192 = vmatprep.subr.mxu0 0.0
    %193 = vmatpush1.msra.mxu0 0.0
    %194 = vmatprep.subr.mxu0 0.0
    %195 = vmatpush1.msra.mxu0 0.0
    %196 = vmatprep.subr.mxu0 0.0
    %197 = vmatpush1.msra.mxu0 0.0
    %198 = vmatprep.subr.mxu0 0.0
    %199 = vmatpush1.msra.mxu0 0.0
    %200 = vmatprep.subr.mxu0 0.0
    %201 = vmatpush1.msra.mxu0 0.0
    %202 = vmatprep.subr.mxu0 0.0
    %203 = vmatpush1.msra.mxu0 0.0
    %204 = vmatprep.subr.mxu0 0.0
    %205 = vmatpush1.msra.mxu0 0.0
    %206 = vmatprep.subr.mxu0 0.0
    %207 = vmatpush1.msra.mxu0 0.0
    %208 = vmatprep.subr.mxu0 0.0
    %209 = vmatpush1.msra.mxu0 0.0
    %210 = vmatprep.subr.mxu0 0.0
    %211 = vmatpush1.msra.mxu0 0.0
    %212 = vmatprep.subr.mxu0 0.0
    %213 = vmatpush1.msra.mxu0 0.0
    %214 = vmatprep.subr.mxu0 0.0
    %215 = vmatpush1.msra.mxu0 0.0
    %216 = vmatprep.subr.mxu0 0.0
    %217 = vmatpush1.msra.mxu0 0.0
    %218 = vmatprep.subr.mxu0 0.0
    %219 = vmatpush1.msra.mxu0 0.0
    %220 = vmatprep.subr.mxu0 0.0
    %221 = vmatpush1.msra.mxu0 0.0
    %222 = vmatprep.mubr.f32.mxu0 0.0
    %223 = vmatmul.mubr.f32.gmra.mrb[0].mxu0 %v156
    %v224 = vpop.f32.mrb[0].mxu0
    %v225 = vadd.f32 %v152, %v224
    %v226 = vpop.f32.mrb[0].mxu0
    %227 = vdwg.mxu0
    %v228 = vmax.f32 %v225, 0.0
    %s229 = scalar_lea.vmem [#allocation2], 32
    %v230 = vld [vmem:[%s229] sm:$0xff]
    %v231 = vld [vmem:[%s229 + $0x8] sm:$0xff]
    %v232 = vld [vmem:[%s229 + $0x10] sm:$0xff]
    %v233 = vld [vmem:[%s229 + $0x18] sm:$0xff]
    %s234 = scalar_lea.vmem %s4, 1
    %v235 = vld [vmem:[%s234] sm:$0x1]
    %v237 = vlaneseq
    %v238 = vshrl.u32 %v237, 7
    %v239 = vsub.s32 0, %v238
    %v240 = vrot.slane %v235, %v239
    %v243 = vsel %vm154, %v228, 0
    %245 = vmatprep.subr.mxu0 0.0
    %246 = vmatpush1.msra.mxu0 %v230
    %247 = vmatprep.subr.mxu0 0.0
    %248 = vmatpush1.msra.mxu0 %v231
    %249 = vmatprep.subr.mxu0 0.0
    %250 = vmatpush1.msra.mxu0 %v232
    %251 = vmatprep.subr.mxu0 0.0
    %252 = vmatpush1.msra.mxu0 %v233
    %253 = vmatprep.subr.mxu0 0.0
    %254 = vmatpush1.msra.mxu0 0.0
    %255 = vmatprep.subr.mxu0 0.0
    %256 = vmatpush1.msra.mxu0 0.0
    %257 = vmatprep.subr.mxu0 0.0
    %258 = vmatpush1.msra.mxu0 0.0
    %259 = vmatprep.subr.mxu0 0.0
    %260 = vmatpush1.msra.mxu0 0.0
    %261 = vmatprep.subr.mxu0 0.0
    %262 = vmatpush1.msra.mxu0 0.0
    %263 = vmatprep.subr.mxu0 0.0
    %264 = vmatpush1.msra.mxu0 0.0
    %265 = vmatprep.subr.mxu0 0.0
    %266 = vmatpush1.msra.mxu0 0.0
    %267 = vmatprep.subr.mxu0 0.0
    %268 = vmatpush1.msra.mxu0 0.0
    %269 = vmatprep.subr.mxu0 0.0
    %270 = vmatpush1.msra.mxu0 0.0
    %271 = vmatprep.subr.mxu0 0.0
    %272 = vmatpush1.msra.mxu0 0.0
    %273 = vmatprep.subr.mxu0 0.0
    %274 = vmatpush1.msra.mxu0 0.0
    %275 = vmatprep.subr.mxu0 0.0
    %276 = vmatpush1.msra.mxu0 0.0
    %277 = vmatprep.subr.mxu0 0.0
    %278 = vmatpush1.msra.mxu0 0.0
    %279 = vmatprep.subr.mxu0 0.0
    %280 = vmatpush1.msra.mxu0 0.0
    %281 = vmatprep.subr.mxu0 0.0
    %282 = vmatpush1.msra.mxu0 0.0
    %283 = vmatprep.subr.mxu0 0.0
    %284 = vmatpush1.msra.mxu0 0.0
    %285 = vmatprep.subr.mxu0 0.0
    %286 = vmatpush1.msra.mxu0 0.0
    %287 = vmatprep.subr.mxu0 0.0
    %288 = vmatpush1.msra.mxu0 0.0
    %289 = vmatprep.subr.mxu0 0.0
    %290 = vmatpush1.msra.mxu0 0.0
    %291 = vmatprep.subr.mxu0 0.0
    %292 = vmatpush1.msra.mxu0 0.0
    %293 = vmatprep.subr.mxu0 0.0
    %294 = vmatpush1.msra.mxu0 0.0
    %295 = vmatprep.subr.mxu0 0.0
    %296 = vmatpush1.msra.mxu0 0.0
    %297 = vmatprep.subr.mxu0 0.0
    %298 = vmatpush1.msra.mxu0 0.0
    %299 = vmatprep.subr.mxu0 0.0
    %300 = vmatpush1.msra.mxu0 0.0
    %301 = vmatprep.subr.mxu0 0.0
    %302 = vmatpush1.msra.mxu0 0.0
    %303 = vmatprep.subr.mxu0 0.0
    %304 = vmatpush1.msra.mxu0 0.0
    %305 = vmatprep.subr.mxu0 0.0
    %306 = vmatpush1.msra.mxu0 0.0
    %307 = vmatprep.subr.mxu0 0.0
    %308 = vmatpush1.msra.mxu0 0.0
    %309 = vmatprep.mubr.f32.mxu0 0.0
    %310 = vmatmul.mubr.f32.gmra.mrb[0].mxu0 %v243
    %v311 = vpop.f32.mrb[0].mxu0
    %v312 = vadd.f32 %v240, %v311
    %v313 = vpop.f32.mrb[0].mxu0
    %314 = vdwg.mxu0
    %v315 = vmax.f32 %v312, 0.0
    %v316 = vld [vmem:[#allocation5] sm:$0xff]
    %v317 = vld [vmem:[#allocation5 + $0x8] sm:$0xff]
    %v318 = vld [vmem:[#allocation5 + $0x10] sm:$0xff]
    %v319 = vld [vmem:[#allocation5 + $0x18] sm:$0xff]
    %v320 = vld [vmem:[%s6] sm:$0x1]
    %v322 = vlaneseq
    %v323 = vshrl.u32 %v322, 7
    %v324 = vsub.s32 0, %v323
    %v325 = vrot.slane %v320, %v324
    %v328 = vsel %vm154, %v315, 0
    %330 = vmatprep.subr.mxu0 0.0
    %331 = vmatpush1.msra.mxu0 %v316
    %332 = vmatprep.subr.mxu0 0.0
    %333 = vmatpush1.msra.mxu0 %v317
    %334 = vmatprep.subr.mxu0 0.0
    %335 = vmatpush1.msra.mxu0 %v318
    %336 = vmatprep.subr.mxu0 0.0
    %337 = vmatpush1.msra.mxu0 %v319
    %338 = vmatprep.subr.mxu0 0.0
    %339 = vmatpush1.msra.mxu0 0.0
    %340 = vmatprep.subr.mxu0 0.0
    %341 = vmatpush1.msra.mxu0 0.0
    %342 = vmatprep.subr.mxu0 0.0
    %343 = vmatpush1.msra.mxu0 0.0
    %344 = vmatprep.subr.mxu0 0.0
    %345 = vmatpush1.msra.mxu0 0.0
    %346 = vmatprep.subr.mxu0 0.0
    %347 = vmatpush1.msra.mxu0 0.0
    %348 = vmatprep.subr.mxu0 0.0
    %349 = vmatpush1.msra.mxu0 0.0
    %350 = vmatprep.subr.mxu0 0.0
    %351 = vmatpush1.msra.mxu0 0.0
    %352 = vmatprep.subr.mxu0 0.0
    %353 = vmatpush1.msra.mxu0 0.0
    %354 = vmatprep.subr.mxu0 0.0
    %355 = vmatpush1.msra.mxu0 0.0
    %356 = vmatprep.subr.mxu0 0.0
    %357 = vmatpush1.msra.mxu0 0.0
    %358 = vmatprep.subr.mxu0 0.0
    %359 = vmatpush1.msra.mxu0 0.0
    %360 = vmatprep.subr.mxu0 0.0
    %361 = vmatpush1.msra.mxu0 0.0
    %362 = vmatprep.subr.mxu0 0.0
    %363 = vmatpush1.msra.mxu0 0.0
    %364 = vmatprep.subr.mxu0 0.0
    %365 = vmatpush1.msra.mxu0 0.0
    %366 = vmatprep.subr.mxu0 0.0
    %367 = vmatpush1.msra.mxu0 0.0
    %368 = vmatprep.subr.mxu0 0.0
    %369 = vmatpush1.msra.mxu0 0.0
    %370 = vmatprep.subr.mxu0 0.0
    %371 = vmatpush1.msra.mxu0 0.0
    %372 = vmatprep.subr.mxu0 0.0
    %373 = vmatpush1.msra.mxu0 0.0
    %374 = vmatprep.subr.mxu0 0.0
    %375 = vmatpush1.msra.mxu0 0.0
    %376 = vmatprep.subr.mxu0 0.0
    %377 = vmatpush1.msra.mxu0 0.0
    %378 = vmatprep.subr.mxu0 0.0
    %379 = vmatpush1.msra.mxu0 0.0
    %380 = vmatprep.subr.mxu0 0.0
    %381 = vmatpush1.msra.mxu0 0.0
    %382 = vmatprep.subr.mxu0 0.0
    %383 = vmatpush1.msra.mxu0 0.0
    %384 = vmatprep.subr.mxu0 0.0
    %385 = vmatpush1.msra.mxu0 0.0
    %386 = vmatprep.subr.mxu0 0.0
    %387 = vmatpush1.msra.mxu0 0.0
    %388 = vmatprep.subr.mxu0 0.0
    %389 = vmatpush1.msra.mxu0 0.0
    %390 = vmatprep.subr.mxu0 0.0
    %391 = vmatpush1.msra.mxu0 0.0
    %392 = vmatprep.subr.mxu0 0.0
    %393 = vmatpush1.msra.mxu0 0.0
    %394 = vmatprep.mubr.f32.mxu0 0.0
    %395 = vmatmul.mubr.f32.gmra.mrb[0].mxu0 %v328
    %v396 = vpop.f32.mrb[0].mxu0
    %v397 = vadd.f32 %v325, %v396
    %v398 = vpop.f32.mrb[0].mxu0
    %399 = vdwg.mxu0
    %400 = vst [vmem:[#allocation7] sm:$0xff] %v397
    // Predicated region
    $region38: #{tpu_custom_call.1} parent=1 // pred_check
      _
    $region39: #{tpu_custom_call.1} parent=1 // pred_check_branch
      %402 = sbr.rel (0) target = $region41
    $region40: #{tpu_custom_call.1} parent=1 // pred_region
      %s404 = ssub.s32 128, 128
      %405 = vsyncadd [#allocation4], %s404
      %s407 = sshll.u32 [#allocation7], 4
      %s408 = int_to_ptr.vmem [resolvable:$true] %s407
      %410 = dma.vmem_to_hbm [thread:$0]  %s408, 128, %s7, [#allocation4]
    $region41: #{tpu_custom_call.1} parent=1 // pred_fallthru
      _
    // Predicated region
    $region42: #{tpu_custom_call.1} parent=1 // pred_check
      _
    $region43: #{tpu_custom_call.1} parent=1 // pred_check_branch
      %412 = sbr.rel (0) target = $region45
    $region44: #{tpu_custom_call.1} parent=1 // pred_region
      %413 = dma.done [#allocation4], 128
    $region45: #{tpu_custom_call.1} parent=1 // pred_fallthru
      _
    %414 = vsyncpa [#allocation3], 1
    %415 = vsyncpa [#allocation6], 1
    %416 = vsyncpa [#allocation4], 1

</llo_original>
